<compile_context>
chip_gen: v7x
topology: tpu7x:2x2x1
jax: 0.10.0
libtpu: 0.0.40
codegen_flags: <defaults>
</compile_context>

<pallas_src>
import math

import jax
import jax.numpy as jnp
from jax.experimental import pallas as pl
from jax.experimental.pallas import tpu as pltpu


def _round_up(x, m):
    return ((x + m - 1) // m) * m


def _vmem_capacity_bytes():
    try:
        return int(pltpu.get_tpu_info().vmem_capacity_bytes)
    except Exception:
        return 64 * 1024 * 1024        # v7x per-TensorCore VMEM (safe floor)


def _pair_transform_kernel(x_ref, y_ref, wx_ref, wy_ref, b_ref, o_ref):
    # x_ref, y_ref  : (tm, H)  activation row tiles (input dtype)
    # wx_ref, wy_ref: (H, tn)  weight column blocks (compute dtype)
    # b_ref         : (1, tn)  bias, f32
    # o_ref         : (tm, tn) output tile
    cdt = wx_ref.dtype
    acc = jnp.dot(x_ref[...].astype(cdt), wx_ref[...],
                  preferred_element_type=jnp.float32)
    acc = acc + jnp.dot(y_ref[...].astype(cdt), wy_ref[...],
                        preferred_element_type=jnp.float32)
    acc = acc + b_ref[...].astype(jnp.float32)       # broadcast (1, tn) rows
    # BERT "gelu" (erf form): 0.5 * x * (1 + erf(x / sqrt(2))).  Kept in f32
    # for faithfulness; bf16 activation / tanh-GeLU is an option if VPU-bound.
    act = 0.5 * acc * (1.0 + jax.lax.erf(acc * (1.0 / math.sqrt(2.0))))
    o_ref[...] = act.astype(o_ref.dtype)


def prepare_pair_transform_params(weight, bias, *, param_dtype=None):
    """Split/transpose the torch Linear(2H->H) weight ONCE, outside the hot path.

    weight: (H, 2H) torch layout (out_features, in_features); bias: (H,).
    Returns (wx, wy, b2): wx/wy of shape (H, H) in `param_dtype` (if given),
    bias reshaped to (1, H) kept in f32 (added onto the f32 accumulator).
    """
    H = weight.shape[0]
    wx = jnp.asarray(weight[:, :H]).T    # (H, H)
    wy = jnp.asarray(weight[:, H:]).T    # (H, H)
    b2 = jnp.asarray(bias, dtype=jnp.float32).reshape(1, H)
    if param_dtype is not None:
        wx = wx.astype(param_dtype)
        wy = wy.astype(param_dtype)
    return wx, wy, b2


def bert_pair_transform_prepared(pair_x, pair_y, wx, wy, b2, *, tm=512, tn=None,
                                 out_dtype=None, vmem_limit_bytes=None):
    """pair_x, pair_y: (B, S, H); wx, wy: (H, H); b2: (1, H) from prepare_*()."""
    B, S, H = pair_x.shape
    M = B * S
    out_dtype = out_dtype if out_dtype is not None else pair_x.dtype
    compute_dtype = wx.dtype
    x_it = jnp.dtype(pair_x.dtype).itemsize
    c_it = jnp.dtype(compute_dtype).itemsize
    o_it = jnp.dtype(out_dtype).itemsize

    # No padding / casting here: the ragged last row tile is handled by
    # Pallas's partial-block masking and the (optional) bf16 cast happens
    # in-kernel on VMEM data.  reshape (B,S,H)->(M,H) is a free collapse.
    x2 = pair_x.reshape(M, H)
    y2 = pair_y.reshape(M, H)

    vmem_cap = int(0.85 * _vmem_capacity_bytes())

    # Row tile: big enough to keep the MXU full and amortise the ~0.35 us/step
    # grid overhead; keep it a multiple of 8 (or the full row count when M<8)
    # and split in two when a single tile would leave a v7x TensorCore idle.
    tm = int(tm)
    if M <= 8:
        tm = M                                    # full-dim row block
    else:
        tm = max(8, min(tm, (M // 8) * 8))
        if pl.cdiv(M, tm) == 1 and M >= 512:
            tm = _round_up(pl.cdiv(M, 2), 8)      # 2+ steps for megacore
    gm = pl.cdiv(M, tm)

    # Column tile: keep the full (H, H) weight halves resident when they fit
    # comfortably (BERT-base/large do); otherwise stream 128-aligned column
    # blocks so large-H configs fit v7x's 64 MiB per-core VMEM.
    if tn is None:
        tn = H if (2 * H * H * c_it) <= vmem_cap // 3 else 512
    tn = min(int(tn), H)
    gn = pl.cdiv(H, tn)
    weights_resident = (tn == H)

    if vmem_limit_bytes is None:
        w_bufs = 1 if weights_resident else 2
        need = (w_bufs * 2 * H * tn * c_it        # Wx, Wy column blocks
                + w_bufs * tn * 4                 # bias (f32)
                + 2 * 2 * tm * H * x_it           # x, y row tiles (2 buffers)
                + 2 * tm * tn * o_it              # output tile (2 buffers)
                + 3 * tm * tn * 4)                # f32 accumulator + GeLU temps
        vmem_limit_bytes = min(vmem_cap,
                               max(int(need * 1.4), 16 * 1024 * 1024))

    cost = pl.CostEstimate(
        flops=4 * M * H * H,
        transcendentals=M * H,
        bytes_accessed=(2 * M * H * x_it + 2 * H * H * c_it + H * 4
                        + M * H * o_it),
    )

    def _call(single_buffer_weights):
        if single_buffer_weights:
            make_w = lambda: pl.BlockSpec((H, tn), lambda i, j: (0, j),
                                          pipeline_mode=pl.Buffered(1))
            b_spec = pl.BlockSpec((1, tn), lambda i, j: (0, j),
                                  pipeline_mode=pl.Buffered(1))
        else:
            make_w = lambda: pl.BlockSpec((H, tn), lambda i, j: (0, j))
            b_spec = pl.BlockSpec((1, tn), lambda i, j: (0, j))
        return pl.pallas_call(
            _pair_transform_kernel,
            out_shape=jax.ShapeDtypeStruct((M, H), out_dtype),
            grid_spec=pltpu.PrefetchScalarGridSpec(
                num_scalar_prefetch=0,
                grid=(gm, gn),
                in_specs=[
                    pl.BlockSpec((tm, H), lambda i, j: (i, 0)),   # x row tile
                    pl.BlockSpec((tm, H), lambda i, j: (i, 0)),   # y row tile
                    make_w(),                                     # Wx cols
                    make_w(),                                     # Wy cols
                    b_spec,                                       # bias
                ],
                out_specs=pl.BlockSpec((tm, tn), lambda i, j: (i, j)),
            ),
            compiler_params=pltpu.CompilerParams(
                dimension_semantics=("parallel", "parallel"),
                vmem_limit_bytes=int(vmem_limit_bytes),
            ),
            cost_estimate=cost,
        )(x2, y2, wx, wy, b2)

    if weights_resident:
        try:
            out = _call(True)
        except Exception:   # fallback for jax builds without Buffered(1) support
            out = _call(False)
    else:
        out = _call(False)
    return out.reshape(B, S, H)


def bert_pair_transform(pair_x, pair_y, weight, bias, *, tm=512, tn=None,
                        param_dtype=None, out_dtype=None):
    """Convenience wrapper taking the torch-layout (H, 2H) weight directly.

    For repeated calls, use prepare_pair_transform_params() once and call
    bert_pair_transform_prepared() so the weight split/transpose is hoisted
    out of the hot path.
    """
    wx, wy, b2 = prepare_pair_transform_params(weight, bias,
                                               param_dtype=param_dtype)
    return bert_pair_transform_prepared(pair_x, pair_y, wx, wy, b2,
                                        tm=tm, tn=tn, out_dtype=out_dtype)


def _reference(pair_x, pair_y, weight, bias):
    h = jnp.concatenate([pair_x, pair_y], axis=-1)
    h = jnp.einsum("bsk,hk->bsh", h, weight) + bias
    return 0.5 * h * (1.0 + jax.lax.erf(h / jnp.sqrt(2.0)))


if __name__ == "__main__":
    # Small config: batch=2, seq=8, hidden=32  ->  dense is Linear(64, 32)
    B, S, H = 2, 8, 32
    key = jax.random.PRNGKey(0)
    kx, ky, kw, kb = jax.random.split(key, 4)

    pair_x = jax.random.normal(kx, (B, S, H), dtype=jnp.float32)
    pair_y = jax.random.normal(ky, (B, S, H), dtype=jnp.float32)
    # Deterministic parameter init (torch-linear-like scale).
    bound = 1.0 / math.sqrt(2 * H)
    weight = jax.random.uniform(kw, (H, 2 * H), jnp.float32, -bound, bound)
    bias = jax.random.uniform(kb, (H,), jnp.float32, -bound, bound)

    ref = _reference(pair_x, pair_y, weight, bias)

    # f32 path (parameters prepared once, outside the per-call hot path).
    wx, wy, b2 = prepare_pair_transform_params(weight, bias)
    out = jax.block_until_ready(
        bert_pair_transform_prepared(pair_x, pair_y, wx, wy, b2))
    assert out.shape == (B, S, H)
    assert jnp.allclose(out, ref, atol=1e-5, rtol=1e-5), "f32 mismatch vs reference"

    # Ragged row count (M = 3*5 = 15, not a multiple of the 8-row sublane tile):
    # exercises the no-pad / masked partial row-tile path.
    kx2, ky2 = jax.random.split(kx)
    px_r = jax.random.normal(kx2, (3, 5, H), dtype=jnp.float32)
    py_r = jax.random.normal(ky2, (3, 5, H), dtype=jnp.float32)
    ref_r = _reference(px_r, py_r, weight, bias)
    out_r = jax.block_until_ready(
        bert_pair_transform_prepared(px_r, py_r, wx, wy, b2))
    assert out_r.shape == (3, 5, H)
    assert jnp.allclose(out_r, ref_r, atol=1e-5, rtol=1e-5), "ragged-M mismatch"

    # bf16 path: bf16 activations end-to-end (no wrapper-side cast pass),
    # bf16 weights on the MXU, f32 accumulate in-kernel, bf16 output.
    wx16, wy16, b216 = prepare_pair_transform_params(weight, bias,
                                                     param_dtype=jnp.bfloat16)
    px16 = pair_x.astype(jnp.bfloat16)   # "upstream" already produces bf16
    py16 = pair_y.astype(jnp.bfloat16)
    out16 = jax.block_until_ready(
        bert_pair_transform_prepared(px16, py16, wx16, wy16, b216))
    assert out16.dtype == jnp.bfloat16
    assert jnp.allclose(out16.astype(jnp.float32), ref,
                        atol=2e-2, rtol=2e-2), "bf16 mismatch vs reference"

    print("KERNEL_OK")
</pallas_src>

<mosaic_0001>
module attributes {stable_mosaic.version = 11 : i64} {
  func.func @_pair_transform_kernel(%arg0: i32, %arg1: i32, %arg2: memref<16x32xf32, #tpu.memory_space<vmem>>, %arg3: memref<16x32xf32, #tpu.memory_space<vmem>>, %arg4: memref<32x32xf32, #tpu.memory_space<vmem>>, %arg5: memref<32x32xf32, #tpu.memory_space<vmem>>, %arg6: memref<1x32xf32, #tpu.memory_space<vmem>>, %arg7: memref<16x32xf32, #tpu.memory_space<vmem>>) attributes {dimension_semantics = [#tpu.dimension_semantics<parallel>, #tpu.dimension_semantics<parallel>], iteration_bounds = array<i64: 1, 1>, scalar_prefetch = 0 : i64, scratch_operands = 0 : i64, tpu.core_type = #tpu.core_type<tc>, window_params = [{transform_indices = @transform_0, window_bounds = array<i64: 16, 32>}, {transform_indices = @transform_1, window_bounds = array<i64: 16, 32>}, {pipeline_mode = #tpu.pipeline_mode<synchronous>, transform_indices = @transform_2, window_bounds = array<i64: 32, 32>}, {pipeline_mode = #tpu.pipeline_mode<synchronous>, transform_indices = @transform_3, window_bounds = array<i64: 32, 32>}, {pipeline_mode = #tpu.pipeline_mode<synchronous>, transform_indices = @transform_4, window_bounds = array<i64: 1, 32>}, {transform_indices = @transform_5, window_bounds = array<i64: 16, 32>}]} {
    %c0 = arith.constant 0 : index
    %c0_0 = arith.constant 0 : index
    %0 = vector.load %arg2[%c0, %c0_0] : memref<16x32xf32, #tpu.memory_space<vmem>>, vector<16x32xf32>
    %c0_1 = arith.constant 0 : index
    %c0_2 = arith.constant 0 : index
    %1 = vector.load %arg4[%c0_1, %c0_2] : memref<32x32xf32, #tpu.memory_space<vmem>>, vector<32x32xf32>
    %cst = arith.constant dense<0.000000e+00> : vector<16x32xf32>
    %2 = tpu.matmul %0, %1, %cst {dimension_numbers = #tpu.dot_dimension_numbers<[1], [0], [0], [1], [0, 0, 1, 1], [], []>} : vector<16x32xf32>, vector<32x32xf32>, vector<16x32xf32> -> vector<16x32xf32>
    %c0_3 = arith.constant 0 : index
    %c0_4 = arith.constant 0 : index
    %3 = vector.load %arg3[%c0_3, %c0_4] : memref<16x32xf32, #tpu.memory_space<vmem>>, vector<16x32xf32>
    %c0_5 = arith.constant 0 : index
    %c0_6 = arith.constant 0 : index
    %4 = vector.load %arg5[%c0_5, %c0_6] : memref<32x32xf32, #tpu.memory_space<vmem>>, vector<32x32xf32>
    %cst_7 = arith.constant dense<0.000000e+00> : vector<16x32xf32>
    %5 = tpu.matmul %3, %4, %cst_7 {dimension_numbers = #tpu.dot_dimension_numbers<[1], [0], [0], [1], [0, 0, 1, 1], [], []>} : vector<16x32xf32>, vector<32x32xf32>, vector<16x32xf32> -> vector<16x32xf32>
    %6 = arith.addf %2, %5 : vector<16x32xf32>
    %c0_8 = arith.constant 0 : index
    %c0_9 = arith.constant 0 : index
    %7 = vector.load %arg6[%c0_8, %c0_9] : memref<1x32xf32, #tpu.memory_space<vmem>>, vector<1x32xf32>
    %8 = vector.broadcast %7 : vector<1x32xf32> to vector<16x32xf32>
    %9 = arith.addf %6, %8 : vector<16x32xf32>
    %cst_10 = arith.constant 5.000000e-01 : f32
    %10 = vector.broadcast %cst_10 : f32 to vector<16x32xf32>
    %11 = arith.mulf %10, %9 : vector<16x32xf32>
    %cst_11 = arith.constant 0.707106769 : f32
    %12 = vector.broadcast %cst_11 : f32 to vector<16x32xf32>
    %13 = arith.mulf %9, %12 : vector<16x32xf32>
    %14 = math.erf %13 : vector<16x32xf32>
    %cst_12 = arith.constant 1.000000e+00 : f32
    %15 = vector.broadcast %cst_12 : f32 to vector<16x32xf32>
    %16 = arith.addf %15, %14 : vector<16x32xf32>
    %17 = arith.mulf %11, %16 : vector<16x32xf32>
    %c0_13 = arith.constant 0 : index
    %c0_14 = arith.constant 0 : index
    %18 = vector.load %arg7[%c0_13, %c0_14] : memref<16x32xf32, #tpu.memory_space<vmem>>, vector<16x32xf32>
    tpu.vector_store %arg7[%c0_13, %c0_14], %17 {strides = array<i32>} : memref<16x32xf32, #tpu.memory_space<vmem>>, vector<16x32xf32>,
    return
  }
  func.func @transform_0(%arg0: i32, %arg1: i32) -> (i32, i32) {
    %c0_i32 = arith.constant 0 : i32
    %c0_i32_0 = arith.constant 0 : i32
    return %arg0, %c0_i32 : i32, i32
  }
  func.func @transform_1(%arg0: i32, %arg1: i32) -> (i32, i32) {
    %c0_i32 = arith.constant 0 : i32
    %c0_i32_0 = arith.constant 0 : i32
    return %arg0, %c0_i32 : i32, i32
  }
  func.func @transform_2(%arg0: i32, %arg1: i32) -> (i32, i32) {
    %c0_i32 = arith.constant 0 : i32
    %c0_i32_0 = arith.constant 0 : i32
    return %c0_i32, %arg1 : i32, i32
  }
  func.func @transform_3(%arg0: i32, %arg1: i32) -> (i32, i32) {
    %c0_i32 = arith.constant 0 : i32
    %c0_i32_0 = arith.constant 0 : i32
    return %c0_i32, %arg1 : i32, i32
  }
  func.func @transform_4(%arg0: i32, %arg1: i32) -> (i32, i32) {
    %c0_i32 = arith.constant 0 : i32
    %c0_i32_0 = arith.constant 0 : i32
    return %c0_i32, %arg1 : i32, i32
  }
  func.func @transform_5(%arg0: i32, %arg1: i32) -> (i32, i32) {
    %c0_i32 = arith.constant 0 : i32
    return %arg0, %arg1 : i32, i32
  }
}

module attributes {stable_mosaic.version = 11 : i64} {
  func.func @_pair_transform_kernel(%arg0: i32, %arg1: i32, %arg2: memref<16x32xf32, #tpu.memory_space<vmem>>, %arg3: memref<16x32xf32, #tpu.memory_space<vmem>>, %arg4: memref<32x32xf32, #tpu.memory_space<vmem>>, %arg5: memref<32x32xf32, #tpu.memory_space<vmem>>, %arg6: memref<1x32xf32, #tpu.memory_space<vmem>>, %arg7: memref<16x32xf32, #tpu.memory_space<vmem>>) attributes {dimension_semantics = [#tpu.dimension_semantics<parallel>, #tpu.dimension_semantics<parallel>], iteration_bounds = array<i64: 1, 1>, scalar_prefetch = 0 : i64, scratch_operands = 0 : i64, tpu.core_type = #tpu.core_type<tc>, window_params = [{transform_indices = @transform_0, window_bounds = array<i64: 16, 32>}, {transform_indices = @transform_1, window_bounds = array<i64: 16, 32>}, {transform_indices = @transform_2, window_bounds = array<i64: 32, 32>}, {transform_indices = @transform_3, window_bounds = array<i64: 32, 32>}, {transform_indices = @transform_4, window_bounds = array<i64: 1, 32>}, {transform_indices = @transform_5, window_bounds = array<i64: 16, 32>}]} {
    %c0 = arith.constant 0 : index
    %c0_0 = arith.constant 0 : index
    %0 = vector.load %arg2[%c0, %c0_0] : memref<16x32xf32, #tpu.memory_space<vmem>>, vector<16x32xf32>
    %c0_1 = arith.constant 0 : index
    %c0_2 = arith.constant 0 : index
    %1 = vector.load %arg4[%c0_1, %c0_2] : memref<32x32xf32, #tpu.memory_space<vmem>>, vector<32x32xf32>
    %cst = arith.constant dense<0.000000e+00> : vector<16x32xf32>
    %2 = tpu.matmul %0, %1, %cst {dimension_numbers = #tpu.dot_dimension_numbers<[1], [0], [0], [1], [0, 0, 1, 1], [], []>} : vector<16x32xf32>, vector<32x32xf32>, vector<16x32xf32> -> vector<16x32xf32>
    %c0_3 = arith.constant 0 : index
    %c0_4 = arith.constant 0 : index
    %3 = vector.load %arg3[%c0_3, %c0_4] : memref<16x32xf32, #tpu.memory_space<vmem>>, vector<16x32xf32>
    %c0_5 = arith.constant 0 : index
    %c0_6 = arith.constant 0 : index
    %4 = vector.load %arg5[%c0_5, %c0_6] : memref<32x32xf32, #tpu.memory_space<vmem>>, vector<32x32xf32>
    %cst_7 = arith.constant dense<0.000000e+00> : vector<16x32xf32>
    %5 = tpu.matmul %3, %4, %cst_7 {dimension_numbers = #tpu.dot_dimension_numbers<[1], [0], [0], [1], [0, 0, 1, 1], [], []>} : vector<16x32xf32>, vector<32x32xf32>, vector<16x32xf32> -> vector<16x32xf32>
    %6 = arith.addf %2, %5 : vector<16x32xf32>
    %c0_8 = arith.constant 0 : index
    %c0_9 = arith.constant 0 : index
    %7 = vector.load %arg6[%c0_8, %c0_9] : memref<1x32xf32, #tpu.memory_space<vmem>>, vector<1x32xf32>
    %8 = vector.broadcast %7 : vector<1x32xf32> to vector<16x32xf32>
    %9 = arith.addf %6, %8 : vector<16x32xf32>
    %cst_10 = arith.constant 5.000000e-01 : f32
    %10 = vector.broadcast %cst_10 : f32 to vector<16x32xf32>
    %11 = arith.mulf %10, %9 : vector<16x32xf32>
    %cst_11 = arith.constant 0.707106769 : f32
    %12 = vector.broadcast %cst_11 : f32 to vector<16x32xf32>
    %13 = arith.mulf %9, %12 : vector<16x32xf32>
    %14 = math.erf %13 : vector<16x32xf32>
    %cst_12 = arith.constant 1.000000e+00 : f32
    %15 = vector.broadcast %cst_12 : f32 to vector<16x32xf32>
    %16 = arith.addf %15, %14 : vector<16x32xf32>
    %17 = arith.mulf %11, %16 : vector<16x32xf32>
    %c0_13 = arith.constant 0 : index
    %c0_14 = arith.constant 0 : index
    %18 = vector.load %arg7[%c0_13, %c0_14] : memref<16x32xf32, #tpu.memory_space<vmem>>, vector<16x32xf32>
    tpu.vector_store %arg7[%c0_13, %c0_14], %17 {strides = array<i32>} : memref<16x32xf32, #tpu.memory_space<vmem>>, vector<16x32xf32>,
    return
  }
  func.func @transform_0(%arg0: i32, %arg1: i32) -> (i32, i32) {
    %c0_i32 = arith.constant 0 : i32
    %c0_i32_0 = arith.constant 0 : i32
    return %arg0, %c0_i32 : i32, i32
  }
  func.func @transform_1(%arg0: i32, %arg1: i32) -> (i32, i32) {
    %c0_i32 = arith.constant 0 : i32
    %c0_i32_0 = arith.constant 0 : i32
    return %arg0, %c0_i32 : i32, i32
  }
  func.func @transform_2(%arg0: i32, %arg1: i32) -> (i32, i32) {
    %c0_i32 = arith.constant 0 : i32
    %c0_i32_0 = arith.constant 0 : i32
    return %c0_i32, %arg1 : i32, i32
  }
  func.func @transform_3(%arg0: i32, %arg1: i32) -> (i32, i32) {
    %c0_i32 = arith.constant 0 : i32
    %c0_i32_0 = arith.constant 0 : i32
    return %c0_i32, %arg1 : i32, i32
  }
  func.func @transform_4(%arg0: i32, %arg1: i32) -> (i32, i32) {
    %c0_i32 = arith.constant 0 : i32
    %c0_i32_0 = arith.constant 0 : i32
    return %c0_i32, %arg1 : i32, i32
  }
  func.func @transform_5(%arg0: i32, %arg1: i32) -> (i32, i32) {
    %c0_i32 = arith.constant 0 : i32
    return %arg0, %arg1 : i32, i32
  }
}

</mosaic_0001>

<llo_original>
// kernel: tpu_custom_call.1
$region0: #{tpu_custom_call.1}
  #allocation0 [shape = 'u32[]', space=smem, size = 0x4, offset = 0x4, fixed_abs, tag = 'smem constant byte address 0x4 - core index']
  #allocation1 [shape = 'u32[144,128]{1,0:T(1,128)}', space=vmem, size = 0x12000, scoped, tag = 'internal scratch']
  %s0 = inlined_call_operand.hbm [shape: f32[16,32], index: 0, kind: input, shape index: {}]
  %s1 = inlined_call_operand.hbm [shape: f32[16,32], index: 1, kind: input, shape index: {}]
  %s2 = inlined_call_operand.hbm [shape: f32[32,32], index: 2, kind: input, shape index: {}]
  %s3 = inlined_call_operand.hbm [shape: f32[32,32], index: 3, kind: input, shape index: {}]
  %s4 = inlined_call_operand.vmem [shape: f32[1,32], index: 4, kind: input, shape index: {}]
  %s5 = inlined_call_operand.hbm [shape: f32[16,32], index: 5, kind: output, shape index: {}]
  %s6 = sld [smem:[#allocation0]]
  $region46: #{tpu_custom_call.1} parent=0
    _
  %s8 = ssub.s32 1, %s6
  %s9 = scalar_select 0, %s8, %s6
  $region1: #{tpu_custom_call.1} parent=0
    #allocation2 [shape = 'u8[8192]{0}', space=vmem, size = 0x2000, scoped, tag = 'input window, operand 0, single buffered']
    #allocation3 [shape = 's32[1]{0}', space=sflag, size = 0x4, scoped, tag = 'scoped memory for tpu_custom_call.1']
    #allocation4 [shape = 's32[1]{0}', space=sflag, size = 0x4, scoped, tag = 'scoped memory for tpu_custom_call.1']
    #allocation5 [shape = 'u8[8192]{0}', space=vmem, size = 0x2000, scoped, tag = 'input window, operand 1, single buffered']
    #allocation6 [shape = 's32[1]{0}', space=sflag, size = 0x4, scoped, tag = 'scoped memory for tpu_custom_call.1']
    #allocation7 [shape = 'u8[16384]{0}', space=vmem, size = 0x4000, scoped, tag = 'input window, operand 2, single buffered']
    #allocation8 [shape = 'u8[16384]{0}', space=vmem, size = 0x4000, scoped, tag = 'input window, operand 3, single buffered']
    #allocation9 [shape = 's32[1]{0}', space=sflag, size = 0x4, scoped, tag = 'scoped memory for tpu_custom_call.1']
    #allocation10 [shape = 'u8[8192]{0}', space=vmem, size = 0x2000, scoped, tag = 'output window, operand 0, single buffered']
    %10 = vsyncpa [#allocation3], 0
    %11 = vsyncpa [#allocation6], 0
    %12 = vsyncpa [#allocation9], 0
    %13 = vsyncpa [#allocation4], 0
    // Predicated region
    $region2: #{tpu_custom_call.1} parent=1 // pred_check
      _
    $region3: #{tpu_custom_call.1} parent=1 // pred_check_branch
      %15 = sbr.rel (0) target = $region5
    $region4: #{tpu_custom_call.1} parent=1 // pred_region
      %s17 = ssub.s32 256, 256
      %18 = vsyncadd [#allocation3], %s17
      %s19 = sshll.u32 [#allocation2], 4
      %s20 = int_to_ptr.vmem [resolvable:$true] %s19
      %25 = dma.hbm_to_vmem [thread:$0]  %s0, 256, %s20, [#allocation3], 128, 128, 8
    $region5: #{tpu_custom_call.1} parent=1 // pred_fallthru
      _
    // Predicated region
    $region6: #{tpu_custom_call.1} parent=1 // pred_check
      _
    $region7: #{tpu_custom_call.1} parent=1 // pred_check_branch
      %27 = sbr.rel (0) target = $region9
    $region8: #{tpu_custom_call.1} parent=1 // pred_region
      %s29 = ssub.s32 256, 256
      %30 = vsyncadd [#allocation6], %s29
      %s31 = sshll.u32 [#allocation5], 4
      %s32 = int_to_ptr.vmem [resolvable:$true] %s31
      %37 = dma.hbm_to_vmem [thread:$0]  %s1, 256, %s32, [#allocation6], 128, 128, 8
    $region9: #{tpu_custom_call.1} parent=1 // pred_fallthru
      _
    // Predicated region
    $region10: #{tpu_custom_call.1} parent=1 // pred_check
      _
    $region11: #{tpu_custom_call.1} parent=1 // pred_check_branch
      %39 = sbr.rel (0) target = $region13
    $region12: #{tpu_custom_call.1} parent=1 // pred_region
      %s41 = ssub.s32 512, 512
      %42 = vsyncadd [#allocation6], %s41
      %s43 = sshll.u32 [#allocation7], 4
      %s44 = int_to_ptr.vmem [resolvable:$true] %s43
      %49 = dma.hbm_to_vmem [thread:$0]  %s2, 512, %s44, [#allocation6], 128, 128, 8
    $region13: #{tpu_custom_call.1} parent=1 // pred_fallthru
      _
    // Predicated region
    $region14: #{tpu_custom_call.1} parent=1 // pred_check
      _
    $region15: #{tpu_custom_call.1} parent=1 // pred_check_branch
      %51 = sbr.rel (0) target = $region17
    $region16: #{tpu_custom_call.1} parent=1 // pred_region
      %s53 = ssub.s32 512, 512
      %54 = vsyncadd [#allocation9], %s53
      %s55 = sshll.u32 [#allocation8], 4
      %s56 = int_to_ptr.vmem [resolvable:$true] %s55
      %61 = dma.hbm_to_vmem [thread:$0]  %s3, 512, %s56, [#allocation9], 128, 128, 8
    $region17: #{tpu_custom_call.1} parent=1 // pred_fallthru
      _
    // Predicated region
    $region18: #{tpu_custom_call.1} parent=1 // pred_check
      _
    $region19: #{tpu_custom_call.1} parent=1 // pred_check_branch
      %63 = sbr.rel (0) target = $region21
    $region20: #{tpu_custom_call.1} parent=1 // pred_region
      _
    $region21: #{tpu_custom_call.1} parent=1 // pred_fallthru
      _
    // Predicated region
    $region22: #{tpu_custom_call.1} parent=1 // pred_check
      _
    $region23: #{tpu_custom_call.1} parent=1 // pred_check_branch
      %65 = sbr.rel (0) target = $region25
    $region24: #{tpu_custom_call.1} parent=1 // pred_region
      %66 = dma.done [#allocation3], 256
    $region25: #{tpu_custom_call.1} parent=1 // pred_fallthru
      _
    // Predicated region
    $region26: #{tpu_custom_call.1} parent=1 // pred_check
      _
    $region27: #{tpu_custom_call.1} parent=1 // pred_check_branch
      %68 = sbr.rel (0) target = $region29
    $region28: #{tpu_custom_call.1} parent=1 // pred_region
      %69 = dma.done [#allocation6], 256
    $region29: #{tpu_custom_call.1} parent=1 // pred_fallthru
      _
    // Predicated region
    $region30: #{tpu_custom_call.1} parent=1 // pred_check
      _
    $region31: #{tpu_custom_call.1} parent=1 // pred_check_branch
      %71 = sbr.rel (0) target = $region33
    $region32: #{tpu_custom_call.1} parent=1 // pred_region
      %72 = dma.done [#allocation6], 512
    $region33: #{tpu_custom_call.1} parent=1 // pred_fallthru
      _
    // Predicated region
    $region34: #{tpu_custom_call.1} parent=1 // pred_check
      _
    $region35: #{tpu_custom_call.1} parent=1 // pred_check_branch
      %74 = sbr.rel (0) target = $region37
    $region36: #{tpu_custom_call.1} parent=1 // pred_region
      %75 = dma.done [#allocation9], 512
    $region37: #{tpu_custom_call.1} parent=1 // pred_fallthru
      _
    %v76 = vld [vmem:[#allocation2] sm:$0xff]
    %v77 = vld [vmem:[#allocation2 + $0x8] sm:$0xff]
    %v78 = vld [vmem:[#allocation7] sm:$0xff]
    %v79 = vld [vmem:[#allocation7 + $0x8] sm:$0xff]
    %v80 = vld [vmem:[#allocation7 + $0x10] sm:$0xff]
    %v81 = vld [vmem:[#allocation7 + $0x18] sm:$0xff]
    %v82 = vld [vmem:[#allocation5] sm:$0xff]
    %v83 = vld [vmem:[#allocation5 + $0x8] sm:$0xff]
    %v84 = vld [vmem:[#allocation8] sm:$0xff]
    %v85 = vld [vmem:[#allocation8 + $0x8] sm:$0xff]
    %v86 = vld [vmem:[#allocation8 + $0x10] sm:$0xff]
    %v87 = vld [vmem:[#allocation8 + $0x18] sm:$0xff]
    %vm88 = vcmask 261120
    %v90 = vsel %vm88, %v82, 0
    %v93 = vsel %vm88, %v83, 0
    %95 = vmatprep.subr.mxu0 0.0
    %96 = vmatpush1.msra.mxu0 %v84
    %97 = vmatprep.subr.mxu0 0.0
    %98 = vmatpush1.msra.mxu0 %v85
    %99 = vmatprep.subr.mxu0 0.0
    %100 = vmatpush1.msra.mxu0 %v86
    %101 = vmatprep.subr.mxu0 0.0
    %102 = vmatpush1.msra.mxu0 %v87
    %103 = vmatprep.subr.mxu0 0.0
    %104 = vmatpush1.msra.mxu0 0.0
    %105 = vmatprep.subr.mxu0 0.0
    %106 = vmatpush1.msra.mxu0 0.0
    %107 = vmatprep.subr.mxu0 0.0
    %108 = vmatpush1.msra.mxu0 0.0
    %109 = vmatprep.subr.mxu0 0.0
    %110 = vmatpush1.msra.mxu0 0.0
    %111 = vmatprep.subr.mxu0 0.0
    %112 = vmatpush1.msra.mxu0 0.0
    %113 = vmatprep.subr.mxu0 0.0
    %114 = vmatpush1.msra.mxu0 0.0
    %115 = vmatprep.subr.mxu0 0.0
    %116 = vmatpush1.msra.mxu0 0.0
    %117 = vmatprep.subr.mxu0 0.0
    %118 = vmatpush1.msra.mxu0 0.0
    %119 = vmatprep.subr.mxu0 0.0
    %120 = vmatpush1.msra.mxu0 0.0
    %121 = vmatprep.subr.mxu0 0.0
    %122 = vmatpush1.msra.mxu0 0.0
    %123 = vmatprep.subr.mxu0 0.0
    %124 = vmatpush1.msra.mxu0 0.0
    %125 = vmatprep.subr.mxu0 0.0
    %126 = vmatpush1.msra.mxu0 0.0
    %127 = vmatprep.subr.mxu0 0.0
    %128 = vmatpush1.msra.mxu0 0.0
    %129 = vmatprep.subr.mxu0 0.0
    %130 = vmatpush1.msra.mxu0 0.0
    %131 = vmatprep.subr.mxu0 0.0
    %132 = vmatpush1.msra.mxu0 0.0
    %133 = vmatprep.subr.mxu0 0.0
    %134 = vmatpush1.msra.mxu0 0.0
    %135 = vmatprep.subr.mxu0 0.0
    %136 = vmatpush1.msra.mxu0 0.0
    %137 = vmatprep.subr.mxu0 0.0
    %138 = vmatpush1.msra.mxu0 0.0
    %139 = vmatprep.subr.mxu0 0.0
    %140 = vmatpush1.msra.mxu0 0.0
    %141 = vmatprep.subr.mxu0 0.0
    %142 = vmatpush1.msra.mxu0 0.0
    %143 = vmatprep.subr.mxu0 0.0
    %144 = vmatpush1.msra.mxu0 0.0
    %145 = vmatprep.subr.mxu0 0.0
    %146 = vmatpush1.msra.mxu0 0.0
    %147 = vmatprep.subr.mxu0 0.0
    %148 = vmatpush1.msra.mxu0 0.0
    %149 = vmatprep.subr.mxu0 0.0
    %150 = vmatpush1.msra.mxu0 0.0
    %151 = vmatprep.subr.mxu0 0.0
    %152 = vmatpush1.msra.mxu0 0.0
    %153 = vmatprep.subr.mxu0 0.0
    %154 = vmatpush1.msra.mxu0 0.0
    %155 = vmatprep.subr.mxu0 0.0
    %156 = vmatpush1.msra.mxu0 0.0
    %157 = vmatprep.subr.mxu0 0.0
    %158 = vmatpush1.msra.mxu0 0.0
    %159 = vmatprep.mubr.f32.mxu0 0.0
    %160 = vmatmul.mubr.f32.gmra.mrb[0].mxu0 %v90
    %v161 = vpop.f32.mrb[0].mxu0
    %v162 = vadd.f32 0.0, %v161
    %v163 = vpop.f32.mrb[0].mxu0
    %164 = vmatprep.mubr.f32.mxu0 0.0
    %165 = vmatmul.mubr.f32.gmra.mrb[0].mxu0 %v93
    %v166 = vpop.f32.mrb[0].mxu0
    %v167 = vadd.f32 0.0, %v166
    %v168 = vpop.f32.mrb[0].mxu0
    %169 = vdwg.mxu0
    %v171 = vsel %vm88, %v76, 0
    %v174 = vsel %vm88, %v77, 0
    %176 = vmatprep.subr.mxu0 0.0
    %177 = vmatpush1.msra.mxu0 %v78
    %178 = vmatprep.subr.mxu0 0.0
    %179 = vmatpush1.msra.mxu0 %v79
    %180 = vmatprep.subr.mxu0 0.0
    %181 = vmatpush1.msra.mxu0 %v80
    %182 = vmatprep.subr.mxu0 0.0
    %183 = vmatpush1.msra.mxu0 %v81
    %184 = vmatprep.subr.mxu0 0.0
    %185 = vmatpush1.msra.mxu0 0.0
    %186 = vmatprep.subr.mxu0 0.0
    %187 = vmatpush1.msra.mxu0 0.0
    %188 = vmatprep.subr.mxu0 0.0
    %189 = vmatpush1.msra.mxu0 0.0
    %190 = vmatprep.subr.mxu0 0.0
    %191 = vmatpush1.msra.mxu0 0.0
    %192 = vmatprep.subr.mxu0 0.0
    %193 = vmatpush1.msra.mxu0 0.0
    %194 = vmatprep.subr.mxu0 0.0
    %195 = vmatpush1.msra.mxu0 0.0
    %196 = vmatprep.subr.mxu0 0.0
    %197 = vmatpush1.msra.mxu0 0.0
    %198 = vmatprep.subr.mxu0 0.0
    %199 = vmatpush1.msra.mxu0 0.0
    %200 = vmatprep.subr.mxu0 0.0
    %201 = vmatpush1.msra.mxu0 0.0
    %202 = vmatprep.subr.mxu0 0.0
    %203 = vmatpush1.msra.mxu0 0.0
    %204 = vmatprep.subr.mxu0 0.0
    %205 = vmatpush1.msra.mxu0 0.0
    %206 = vmatprep.subr.mxu0 0.0
    %207 = vmatpush1.msra.mxu0 0.0
    %208 = vmatprep.subr.mxu0 0.0
    %209 = vmatpush1.msra.mxu0 0.0
    %210 = vmatprep.subr.mxu0 0.0
    %211 = vmatpush1.msra.mxu0 0.0
    %212 = vmatprep.subr.mxu0 0.0
    %213 = vmatpush1.msra.mxu0 0.0
    %214 = vmatprep.subr.mxu0 0.0
    %215 = vmatpush1.msra.mxu0 0.0
    %216 = vmatprep.subr.mxu0 0.0
    %217 = vmatpush1.msra.mxu0 0.0
    %218 = vmatprep.subr.mxu0 0.0
    %219 = vmatpush1.msra.mxu0 0.0
    %220 = vmatprep.subr.mxu0 0.0
    %221 = vmatpush1.msra.mxu0 0.0
    %222 = vmatprep.subr.mxu0 0.0
    %223 = vmatpush1.msra.mxu0 0.0
    %224 = vmatprep.subr.mxu0 0.0
    %225 = vmatpush1.msra.mxu0 0.0
    %226 = vmatprep.subr.mxu0 0.0
    %227 = vmatpush1.msra.mxu0 0.0
    %228 = vmatprep.subr.mxu0 0.0
    %229 = vmatpush1.msra.mxu0 0.0
    %230 = vmatprep.subr.mxu0 0.0
    %231 = vmatpush1.msra.mxu0 0.0
    %232 = vmatprep.subr.mxu0 0.0
    %233 = vmatpush1.msra.mxu0 0.0
    %234 = vmatprep.subr.mxu0 0.0
    %235 = vmatpush1.msra.mxu0 0.0
    %236 = vmatprep.subr.mxu0 0.0
    %237 = vmatpush1.msra.mxu0 0.0
    %238 = vmatprep.subr.mxu0 0.0
    %239 = vmatpush1.msra.mxu0 0.0
    %240 = vmatprep.mubr.f32.mxu0 0.0
    %241 = vmatmul.mubr.f32.gmra.mrb[0].mxu0 %v171
    %v242 = vpop.f32.mrb[0].mxu0
    %v243 = vadd.f32 %v162, %v242
    %v244 = vpop.f32.mrb[0].mxu0
    %245 = vmatprep.mubr.f32.mxu0 0.0
    %246 = vmatmul.mubr.f32.gmra.mrb[0].mxu0 %v174
    %v247 = vpop.f32.mrb[0].mxu0
    %v248 = vadd.f32 %v167, %v247
    %v249 = vpop.f32.mrb[0].mxu0
    %250 = vdwg.mxu0
    %v251 = vld [vmem:[%s4] sm:$0x1]
    %v253 = vlaneseq
    %v254 = vshrl.u32 %v253, 7
    %v255 = vsub.s32 0, %v254
    %v256 = vrot.slane %v251, %v255
    %v258 = vadd.f32 %v243, %v256
    %v259 = vadd.f32 %v248, %v256
    %v260 = vmul.f32 %v258, 0.5
    %v261 = vmul.f32 %v259, 0.5
    %v262 = vmul.f32 %v258, 0.70710677
    %v263 = vmul.f32 %v259, 0.70710677
    %v264 = verf.f32.pop %v262
    %v265 = verf.f32.pop %v263
    %v266 = vadd.f32 %v264, 1.0
    %v267 = vadd.f32 %v265, 1.0
    %v268 = vmul.f32 %v260, %v266
    %v269 = vmul.f32 %v261, %v267
    %270 = vst.msk [vmem:[#allocation10] sm:$0xff] %vm88, %v268
    %271 = vst.msk [vmem:[#allocation10 + $0x8] sm:$0xff] %vm88, %v269
    // Predicated region
    $region38: #{tpu_custom_call.1} parent=1 // pred_check
      _
    $region39: #{tpu_custom_call.1} parent=1 // pred_check_branch
      %273 = sbr.rel (0) target = $region41
    $region40: #{tpu_custom_call.1} parent=1 // pred_region
      %s275 = ssub.s32 256, 256
      %276 = vsyncadd [#allocation4], %s275
      %s277 = sshll.u32 [#allocation10], 4
      %s278 = int_to_ptr.vmem [resolvable:$true] %s277
      %283 = dma.vmem_to_hbm [thread:$0]  %s278, 256, %s5, [#allocation4], 128, 128, 8
    $region41: #{tpu_custom_call.1} parent=1 // pred_fallthru
      _
    // Predicated region
    $region42: #{tpu_custom_call.1} parent=1 // pred_check
      _
    $region43: #{tpu_custom_call.1} parent=1 // pred_check_branch
      %285 = sbr.rel (0) target = $region45
    $region44: #{tpu_custom_call.1} parent=1 // pred_region
      %286 = dma.done [#allocation4], 256
    $region45: #{tpu_custom_call.1} parent=1 // pred_fallthru
      _
    %287 = vsyncpa [#allocation3], 1
    %288 = vsyncpa [#allocation6], 1
    %289 = vsyncpa [#allocation9], 1
    %290 = vsyncpa [#allocation4], 1

// kernel: tpu_custom_call.1
$region0: #{tpu_custom_call.1}
  #allocation0 [shape = 'u32[]', space=smem, size = 0x4, offset = 0x4, fixed_abs, tag = 'smem constant byte address 0x4 - core index']
  #allocation1 [shape = 'u32[144,128]{1,0:T(1,128)}', space=vmem, size = 0x12000, scoped, tag = 'internal scratch']
  %s0 = inlined_call_operand.hbm [shape: f32[16,32], index: 0, kind: input, shape index: {}]
  %s1 = inlined_call_operand.hbm [shape: f32[16,32], index: 1, kind: input, shape index: {}]
  %s2 = inlined_call_operand.hbm [shape: f32[32,32], index: 2, kind: input, shape index: {}]
  %s3 = inlined_call_operand.hbm [shape: f32[32,32], index: 3, kind: input, shape index: {}]
  %s4 = inlined_call_operand.vmem [shape: f32[1,32], index: 4, kind: input, shape index: {}]
  %s5 = inlined_call_operand.hbm [shape: f32[16,32], index: 5, kind: output, shape index: {}]
  %s6 = sld [smem:[#allocation0]]
  $region46: #{tpu_custom_call.1} parent=0
    _
  %s8 = ssub.s32 1, %s6
  %s9 = scalar_select 0, %s8, %s6
  $region1: #{tpu_custom_call.1} parent=0
    #allocation2 [shape = 'u8[8192]{0}', space=vmem, size = 0x2000, scoped, tag = 'input window, operand 0, single buffered']
    #allocation3 [shape = 's32[1]{0}', space=sflag, size = 0x4, scoped, tag = 'scoped memory for tpu_custom_call.1']
    #allocation4 [shape = 's32[1]{0}', space=sflag, size = 0x4, scoped, tag = 'scoped memory for tpu_custom_call.1']
    #allocation5 [shape = 'u8[8192]{0}', space=vmem, size = 0x2000, scoped, tag = 'input window, operand 1, single buffered']
    #allocation6 [shape = 's32[1]{0}', space=sflag, size = 0x4, scoped, tag = 'scoped memory for tpu_custom_call.1']
    #allocation7 [shape = 'u8[16384]{0}', space=vmem, size = 0x4000, scoped, tag = 'input window, operand 2, single buffered']
    #allocation8 [shape = 'u8[16384]{0}', space=vmem, size = 0x4000, scoped, tag = 'input window, operand 3, single buffered']
    #allocation9 [shape = 's32[1]{0}', space=sflag, size = 0x4, scoped, tag = 'scoped memory for tpu_custom_call.1']
    #allocation10 [shape = 'u8[8192]{0}', space=vmem, size = 0x2000, scoped, tag = 'output window, operand 0, single buffered']
    %10 = vsyncpa [#allocation3], 0
    %11 = vsyncpa [#allocation6], 0
    %12 = vsyncpa [#allocation9], 0
    %13 = vsyncpa [#allocation4], 0
    // Predicated region
    $region2: #{tpu_custom_call.1} parent=1 // pred_check
      _
    $region3: #{tpu_custom_call.1} parent=1 // pred_check_branch
      %15 = sbr.rel (0) target = $region5
    $region4: #{tpu_custom_call.1} parent=1 // pred_region
      %s17 = ssub.s32 256, 256
      %18 = vsyncadd [#allocation3], %s17
      %s19 = sshll.u32 [#allocation2], 4
      %s20 = int_to_ptr.vmem [resolvable:$true] %s19
      %25 = dma.hbm_to_vmem [thread:$0]  %s0, 256, %s20, [#allocation3], 128, 128, 8
    $region5: #{tpu_custom_call.1} parent=1 // pred_fallthru
      _
    // Predicated region
    $region6: #{tpu_custom_call.1} parent=1 // pred_check
      _
    $region7: #{tpu_custom_call.1} parent=1 // pred_check_branch
      %27 = sbr.rel (0) target = $region9
    $region8: #{tpu_custom_call.1} parent=1 // pred_region
      %s29 = ssub.s32 256, 256
      %30 = vsyncadd [#allocation6], %s29
      %s31 = sshll.u32 [#allocation5], 4
      %s32 = int_to_ptr.vmem [resolvable:$true] %s31
      %37 = dma.hbm_to_vmem [thread:$0]  %s1, 256, %s32, [#allocation6], 128, 128, 8
    $region9: #{tpu_custom_call.1} parent=1 // pred_fallthru
      _
    // Predicated region
    $region10: #{tpu_custom_call.1} parent=1 // pred_check
      _
    $region11: #{tpu_custom_call.1} parent=1 // pred_check_branch
      %39 = sbr.rel (0) target = $region13
    $region12: #{tpu_custom_call.1} parent=1 // pred_region
      %s41 = ssub.s32 512, 512
      %42 = vsyncadd [#allocation6], %s41
      %s43 = sshll.u32 [#allocation7], 4
      %s44 = int_to_ptr.vmem [resolvable:$true] %s43
      %49 = dma.hbm_to_vmem [thread:$0]  %s2, 512, %s44, [#allocation6], 128, 128, 8
    $region13: #{tpu_custom_call.1} parent=1 // pred_fallthru
      _
    // Predicated region
    $region14: #{tpu_custom_call.1} parent=1 // pred_check
      _
    $region15: #{tpu_custom_call.1} parent=1 // pred_check_branch
      %51 = sbr.rel (0) target = $region17
    $region16: #{tpu_custom_call.1} parent=1 // pred_region
      %s53 = ssub.s32 512, 512
      %54 = vsyncadd [#allocation9], %s53
      %s55 = sshll.u32 [#allocation8], 4
      %s56 = int_to_ptr.vmem [resolvable:$true] %s55
      %61 = dma.hbm_to_vmem [thread:$0]  %s3, 512, %s56, [#allocation9], 128, 128, 8
    $region17: #{tpu_custom_call.1} parent=1 // pred_fallthru
      _
    // Predicated region
    $region18: #{tpu_custom_call.1} parent=1 // pred_check
      _
    $region19: #{tpu_custom_call.1} parent=1 // pred_check_branch
      %63 = sbr.rel (0) target = $region21
    $region20: #{tpu_custom_call.1} parent=1 // pred_region
      _
    $region21: #{tpu_custom_call.1} parent=1 // pred_fallthru
      _
    // Predicated region
    $region22: #{tpu_custom_call.1} parent=1 // pred_check
      _
    $region23: #{tpu_custom_call.1} parent=1 // pred_check_branch
      %65 = sbr.rel (0) target = $region25
    $region24: #{tpu_custom_call.1} parent=1 // pred_region
      %66 = dma.done [#allocation3], 256
    $region25: #{tpu_custom_call.1} parent=1 // pred_fallthru
      _
    // Predicated region
    $region26: #{tpu_custom_call.1} parent=1 // pred_check
      _
    $region27: #{tpu_custom_call.1} parent=1 // pred_check_branch
      %68 = sbr.rel (0) target = $region29
    $region28: #{tpu_custom_call.1} parent=1 // pred_region
      %69 = dma.done [#allocation6], 256
    $region29: #{tpu_custom_call.1} parent=1 // pred_fallthru
      _
    // Predicated region
    $region30: #{tpu_custom_call.1} parent=1 // pred_check
      _
    $region31: #{tpu_custom_call.1} parent=1 // pred_check_branch
      %71 = sbr.rel (0) target = $region33
    $region32: #{tpu_custom_call.1} parent=1 // pred_region
      %72 = dma.done [#allocation6], 512
    $region33: #{tpu_custom_call.1} parent=1 // pred_fallthru
      _
    // Predicated region
    $region34: #{tpu_custom_call.1} parent=1 // pred_check
      _
    $region35: #{tpu_custom_call.1} parent=1 // pred_check_branch
      %74 = sbr.rel (0) target = $region37
    $region36: #{tpu_custom_call.1} parent=1 // pred_region
      %75 = dma.done [#allocation9], 512
    $region37: #{tpu_custom_call.1} parent=1 // pred_fallthru
      _
    %v76 = vld [vmem:[#allocation2] sm:$0xff]
    %v77 = vld [vmem:[#allocation2 + $0x8] sm:$0xff]
    %v78 = vld [vmem:[#allocation7] sm:$0xff]
    %v79 = vld [vmem:[#allocation7 + $0x8] sm:$0xff]
    %v80 = vld [vmem:[#allocation7 + $0x10] sm:$0xff]
    %v81 = vld [vmem:[#allocation7 + $0x18] sm:$0xff]
    %v82 = vld [vmem:[#allocation5] sm:$0xff]
    %v83 = vld [vmem:[#allocation5 + $0x8] sm:$0xff]
    %v84 = vld [vmem:[#allocation8] sm:$0xff]
    %v85 = vld [vmem:[#allocation8 + $0x8] sm:$0xff]
    %v86 = vld [vmem:[#allocation8 + $0x10] sm:$0xff]
    %v87 = vld [vmem:[#allocation8 + $0x18] sm:$0xff]
    %vm88 = vcmask 261120
    %v90 = vsel %vm88, %v82, 0
    %v93 = vsel %vm88, %v83, 0
    %95 = vmatprep.subr.mxu0 0.0
    %96 = vmatpush1.msra.mxu0 %v84
    %97 = vmatprep.subr.mxu0 0.0
    %98 = vmatpush1.msra.mxu0 %v85
    %99 = vmatprep.subr.mxu0 0.0
    %100 = vmatpush1.msra.mxu0 %v86
    %101 = vmatprep.subr.mxu0 0.0
    %102 = vmatpush1.msra.mxu0 %v87
    %103 = vmatprep.subr.mxu0 0.0
    %104 = vmatpush1.msra.mxu0 0.0
    %105 = vmatprep.subr.mxu0 0.0
    %106 = vmatpush1.msra.mxu0 0.0
    %107 = vmatprep.subr.mxu0 0.0
    %108 = vmatpush1.msra.mxu0 0.0
    %109 = vmatprep.subr.mxu0 0.0
    %110 = vmatpush1.msra.mxu0 0.0
    %111 = vmatprep.subr.mxu0 0.0
    %112 = vmatpush1.msra.mxu0 0.0
    %113 = vmatprep.subr.mxu0 0.0
    %114 = vmatpush1.msra.mxu0 0.0
    %115 = vmatprep.subr.mxu0 0.0
    %116 = vmatpush1.msra.mxu0 0.0
    %117 = vmatprep.subr.mxu0 0.0
    %118 = vmatpush1.msra.mxu0 0.0
    %119 = vmatprep.subr.mxu0 0.0
    %120 = vmatpush1.msra.mxu0 0.0
    %121 = vmatprep.subr.mxu0 0.0
    %122 = vmatpush1.msra.mxu0 0.0
    %123 = vmatprep.subr.mxu0 0.0
    %124 = vmatpush1.msra.mxu0 0.0
    %125 = vmatprep.subr.mxu0 0.0
    %126 = vmatpush1.msra.mxu0 0.0
    %127 = vmatprep.subr.mxu0 0.0
    %128 = vmatpush1.msra.mxu0 0.0
    %129 = vmatprep.subr.mxu0 0.0
    %130 = vmatpush1.msra.mxu0 0.0
    %131 = vmatprep.subr.mxu0 0.0
    %132 = vmatpush1.msra.mxu0 0.0
    %133 = vmatprep.subr.mxu0 0.0
    %134 = vmatpush1.msra.mxu0 0.0
    %135 = vmatprep.subr.mxu0 0.0
    %136 = vmatpush1.msra.mxu0 0.0
    %137 = vmatprep.subr.mxu0 0.0
    %138 = vmatpush1.msra.mxu0 0.0
    %139 = vmatprep.subr.mxu0 0.0
    %140 = vmatpush1.msra.mxu0 0.0
    %141 = vmatprep.subr.mxu0 0.0
    %142 = vmatpush1.msra.mxu0 0.0
    %143 = vmatprep.subr.mxu0 0.0
    %144 = vmatpush1.msra.mxu0 0.0
    %145 = vmatprep.subr.mxu0 0.0
    %146 = vmatpush1.msra.mxu0 0.0
    %147 = vmatprep.subr.mxu0 0.0
    %148 = vmatpush1.msra.mxu0 0.0
    %149 = vmatprep.subr.mxu0 0.0
    %150 = vmatpush1.msra.mxu0 0.0
    %151 = vmatprep.subr.mxu0 0.0
    %152 = vmatpush1.msra.mxu0 0.0
    %153 = vmatprep.subr.mxu0 0.0
    %154 = vmatpush1.msra.mxu0 0.0
    %155 = vmatprep.subr.mxu0 0.0
    %156 = vmatpush1.msra.mxu0 0.0
    %157 = vmatprep.subr.mxu0 0.0
    %158 = vmatpush1.msra.mxu0 0.0
    %159 = vmatprep.mubr.f32.mxu0 0.0
    %160 = vmatmul.mubr.f32.gmra.mrb[0].mxu0 %v90
    %v161 = vpop.f32.mrb[0].mxu0
    %v162 = vadd.f32 0.0, %v161
    %v163 = vpop.f32.mrb[0].mxu0
    %164 = vmatprep.mubr.f32.mxu0 0.0
    %165 = vmatmul.mubr.f32.gmra.mrb[0].mxu0 %v93
    %v166 = vpop.f32.mrb[0].mxu0
    %v167 = vadd.f32 0.0, %v166
    %v168 = vpop.f32.mrb[0].mxu0
    %169 = vdwg.mxu0
    %v171 = vsel %vm88, %v76, 0
    %v174 = vsel %vm88, %v77, 0
    %176 = vmatprep.subr.mxu0 0.0
    %177 = vmatpush1.msra.mxu0 %v78
    %178 = vmatprep.subr.mxu0 0.0
    %179 = vmatpush1.msra.mxu0 %v79
    %180 = vmatprep.subr.mxu0 0.0
    %181 = vmatpush1.msra.mxu0 %v80
    %182 = vmatprep.subr.mxu0 0.0
    %183 = vmatpush1.msra.mxu0 %v81
    %184 = vmatprep.subr.mxu0 0.0
    %185 = vmatpush1.msra.mxu0 0.0
    %186 = vmatprep.subr.mxu0 0.0
    %187 = vmatpush1.msra.mxu0 0.0
    %188 = vmatprep.subr.mxu0 0.0
    %189 = vmatpush1.msra.mxu0 0.0
    %190 = vmatprep.subr.mxu0 0.0
    %191 = vmatpush1.msra.mxu0 0.0
    %192 = vmatprep.subr.mxu0 0.0
    %193 = vmatpush1.msra.mxu0 0.0
    %194 = vmatprep.subr.mxu0 0.0
    %195 = vmatpush1.msra.mxu0 0.0
    %196 = vmatprep.subr.mxu0 0.0
    %197 = vmatpush1.msra.mxu0 0.0
    %198 = vmatprep.subr.mxu0 0.0
    %199 = vmatpush1.msra.mxu0 0.0
    %200 = vmatprep.subr.mxu0 0.0
    %201 = vmatpush1.msra.mxu0 0.0
    %202 = vmatprep.subr.mxu0 0.0
    %203 = vmatpush1.msra.mxu0 0.0
    %204 = vmatprep.subr.mxu0 0.0
    %205 = vmatpush1.msra.mxu0 0.0
    %206 = vmatprep.subr.mxu0 0.0
    %207 = vmatpush1.msra.mxu0 0.0
    %208 = vmatprep.subr.mxu0 0.0
    %209 = vmatpush1.msra.mxu0 0.0
    %210 = vmatprep.subr.mxu0 0.0
    %211 = vmatpush1.msra.mxu0 0.0
    %212 = vmatprep.subr.mxu0 0.0
    %213 = vmatpush1.msra.mxu0 0.0
    %214 = vmatprep.subr.mxu0 0.0
    %215 = vmatpush1.msra.mxu0 0.0
    %216 = vmatprep.subr.mxu0 0.0
    %217 = vmatpush1.msra.mxu0 0.0
    %218 = vmatprep.subr.mxu0 0.0
    %219 = vmatpush1.msra.mxu0 0.0
    %220 = vmatprep.subr.mxu0 0.0
    %221 = vmatpush1.msra.mxu0 0.0
    %222 = vmatprep.subr.mxu0 0.0
    %223 = vmatpush1.msra.mxu0 0.0
    %224 = vmatprep.subr.mxu0 0.0
    %225 = vmatpush1.msra.mxu0 0.0
    %226 = vmatprep.subr.mxu0 0.0
    %227 = vmatpush1.msra.mxu0 0.0
    %228 = vmatprep.subr.mxu0 0.0
    %229 = vmatpush1.msra.mxu0 0.0
    %230 = vmatprep.subr.mxu0 0.0
    %231 = vmatpush1.msra.mxu0 0.0
    %232 = vmatprep.subr.mxu0 0.0
    %233 = vmatpush1.msra.mxu0 0.0
    %234 = vmatprep.subr.mxu0 0.0
    %235 = vmatpush1.msra.mxu0 0.0
    %236 = vmatprep.subr.mxu0 0.0
    %237 = vmatpush1.msra.mxu0 0.0
    %238 = vmatprep.subr.mxu0 0.0
    %239 = vmatpush1.msra.mxu0 0.0
    %240 = vmatprep.mubr.f32.mxu0 0.0
    %241 = vmatmul.mubr.f32.gmra.mrb[0].mxu0 %v171
    %v242 = vpop.f32.mrb[0].mxu0
    %v243 = vadd.f32 %v162, %v242
    %v244 = vpop.f32.mrb[0].mxu0
    %245 = vmatprep.mubr.f32.mxu0 0.0
    %246 = vmatmul.mubr.f32.gmra.mrb[0].mxu0 %v174
    %v247 = vpop.f32.mrb[0].mxu0
    %v248 = vadd.f32 %v167, %v247
    %v249 = vpop.f32.mrb[0].mxu0
    %250 = vdwg.mxu0
    %v251 = vld [vmem:[%s4] sm:$0x1]
    %v253 = vlaneseq
    %v254 = vshrl.u32 %v253, 7
    %v255 = vsub.s32 0, %v254
    %v256 = vrot.slane %v251, %v255
    %v258 = vadd.f32 %v243, %v256
    %v259 = vadd.f32 %v248, %v256
    %v260 = vmul.f32 %v258, 0.5
    %v261 = vmul.f32 %v259, 0.5
    %v262 = vmul.f32 %v258, 0.70710677
    %v263 = vmul.f32 %v259, 0.70710677
    %v264 = verf.f32.pop %v262
    %v265 = verf.f32.pop %v263
    %v266 = vadd.f32 %v264, 1.0
    %v267 = vadd.f32 %v265, 1.0
    %v268 = vmul.f32 %v260, %v266
    %v269 = vmul.f32 %v261, %v267
    %270 = vst.msk [vmem:[#allocation10] sm:$0xff] %vm88, %v268
    %271 = vst.msk [vmem:[#allocation10 + $0x8] sm:$0xff] %vm88, %v269
    // Predicated region
    $region38: #{tpu_custom_call.1} parent=1 // pred_check
      _
    $region39: #{tpu_custom_call.1} parent=1 // pred_check_branch
      %273 = sbr.rel (0) target = $region41
    $region40: #{tpu_custom_call.1} parent=1 // pred_region
      %s275 = ssub.s32 256, 256
      %276 = vsyncadd [#allocation4], %s275
      %s277 = sshll.u32 [#allocation10], 4
      %s278 = int_to_ptr.vmem [resolvable:$true] %s277
      %283 = dma.vmem_to_hbm [thread:$0]  %s278, 256, %s5, [#allocation4], 128, 128, 8
    $region41: #{tpu_custom_call.1} parent=1 // pred_fallthru
      _
    // Predicated region
    $region42: #{tpu_custom_call.1} parent=1 // pred_check
      _
    $region43: #{tpu_custom_call.1} parent=1 // pred_check_branch
      %285 = sbr.rel (0) target = $region45
    $region44: #{tpu_custom_call.1} parent=1 // pred_region
      %286 = dma.done [#allocation4], 256
    $region45: #{tpu_custom_call.1} parent=1 // pred_fallthru
      _
    %287 = vsyncpa [#allocation3], 1
    %288 = vsyncpa [#allocation6], 1
    %289 = vsyncpa [#allocation9], 1
    %290 = vsyncpa [#allocation4], 1

</llo_original>
